<compile_context>
chip_gen: v5e
topology: v5e:2x2
jax: 0.10.0
libtpu: 0.0.40
codegen_flags: <defaults>
</compile_context>

<pallas_src>
import functools
import math

import jax
import jax.numpy as jnp
from jax.experimental import pallas as pl
from jax.experimental.pallas import tpu as pltpu


_TARGET_BYTES = 2 * 1024 * 1024   # ~2 MiB per grid step -> HBM-roofline territory
_CAP_BYTES = 4 * 1024 * 1024      # per-buffer cap: 2x double-buffered input <= 8 MiB
_VMEM_LIMIT = 32 * 1024 * 1024    # explicit scoped-VMEM limit (safe on v5e/v6e/v7x)
_TINY_BYTES = 1 << 20             # below this, use the single-block fast path


def _cdiv(a, b):
    return (a + b - 1) // b


def _round_up(x, m):
    return _cdiv(x, m) * m


# ----------------------------------------------------------------------------
# Kernels
# ----------------------------------------------------------------------------
def _mean_tiny_kernel(x_ref, o_ref, *, inv_n):
    # Whole (b, n, c) array in one VMEM block; single grid step.
    s = jnp.sum(x_ref[...].astype(jnp.float32), axis=1, keepdims=True)
    o_ref[...] = (s * inv_n).astype(o_ref.dtype)


def _mean_mid_kernel(x_ref, o_ref, acc_ref, *, inv_n, n_total, block_n, needs_mask):
    # x_ref:   (TB, TN, TC)   input tile
    # o_ref:   (TB, 1, TC)    mean over the reduced axis (written on last step)
    # acc_ref: (TB, 1, TC) f32 running sum, persistent across the reduction axis
    ni = pl.program_id(2)

    @pl.when(ni == 0)
    def _init():
        acc_ref[...] = jnp.zeros_like(acc_ref)

    tile = x_ref[...].astype(jnp.float32)
    if needs_mask:
        row = jax.lax.broadcasted_iota(jnp.int32, tile.shape, 1) + ni * block_n
        tile = jnp.where(row < n_total, tile, 0.0)
    acc_ref[...] += jnp.sum(tile, axis=1, keepdims=True)

    @pl.when(ni == pl.num_programs(2) - 1)
    def _fin():
        o_ref[...] = (acc_ref[...] * inv_n).astype(o_ref.dtype)


def _mean_last_kernel(x_ref, o_ref, acc_ref, *, inv_n, n_total, block_n, needs_mask):
    # Lane-dense path for reducing the last axis (collapsed suffix == 1).
    # x_ref:   (TB, TN)    input tile (reduced axis on lanes)
    # o_ref:   (TB, 1)     mean (written on last step)
    # acc_ref: (TB, 1) f32 running sum
    ni = pl.program_id(1)

    @pl.when(ni == 0)
    def _init():
        acc_ref[...] = jnp.zeros_like(acc_ref)

    tile = x_ref[...].astype(jnp.float32)
    if needs_mask:
        col = jax.lax.broadcasted_iota(jnp.int32, tile.shape, 1) + ni * block_n
        tile = jnp.where(col < n_total, tile, 0.0)
    acc_ref[...] += jnp.sum(tile, axis=1, keepdims=True)

    @pl.when(ni == pl.num_programs(1) - 1)
    def _fin():
        o_ref[...] = (acc_ref[...] * inv_n).astype(o_ref.dtype)


# ----------------------------------------------------------------------------
# Tile selection
# ----------------------------------------------------------------------------
def _choose_tiles_mid(b, n, c, itemsize):
    """Tiles for the (b, n, c) mid-axis reduction; returns (block_b, block_n, block_c)."""
    sub = max(8, 32 // itemsize)               # dtype-aware sublane multiple
    block_c = c if c <= 2048 else 2048         # lane tile: full c, or 128-multiple chunk
    row_bytes = block_c * itemsize

    want = _round_up(max(sub, _TARGET_BYTES // row_bytes), sub)
    if want * row_bytes > _CAP_BYTES:
        want = max(sub, (_CAP_BYTES // row_bytes) // sub * sub)
    block_n = n if want >= n else want         # == full dim (any n), or sub-multiple

    block_b = 1
    if block_n >= n and block_n * row_bytes < _TARGET_BYTES and b > 1:
        block_b = max(1, min(b, _TARGET_BYTES // max(block_n * row_bytes, 1)))
        if c <= block_c and b >= 2:
            # keep >= 2 blocks on a parallel axis so both v7x TensorCores get work
            block_b = min(block_b, _cdiv(b, 2))
    return block_b, block_n, block_c


def _choose_tiles_last(b, n, itemsize):
    """Tiles for the (b, n) last-axis reduction; returns (block_b, block_n)."""
    LANE = 128
    sub = max(8, 32 // itemsize)

    want = _round_up(max(LANE, _TARGET_BYTES // (sub * itemsize)), LANE)
    if sub * want * itemsize > _CAP_BYTES:
        want = max(LANE, (_CAP_BYTES // (sub * itemsize)) // LANE * LANE)
    block_n = n if want >= n else want         # == full dim (any n), or 128-multiple

    block_b = b if b <= sub else sub
    if block_n >= n and block_b * block_n * itemsize < _TARGET_BYTES and b > block_b:
        rows = _round_up(max(sub, _TARGET_BYTES // max(block_n * itemsize, 1)), sub)
        if b >= 2 * sub:
            rows = min(rows, _round_up(_cdiv(b, 2), sub))   # megacore: keep >= 2 blocks
        block_b = b if rows >= b else rows
    return block_b, block_n


# ----------------------------------------------------------------------------
# Wrapper (equivalent of Mean.forward for a single int dim)
# ----------------------------------------------------------------------------
def mean_forward(x, dim, keep_dim=False, *, _force_grid=False, _block_n=None):
    """Pallas equivalent of `x.mean(dim, keepdim=keep_dim)` for a single int dim."""
    ndim = x.ndim
    d = dim % ndim
    shape = x.shape
    b = math.prod(shape[:d]) if d > 0 else 1
    n = shape[d]
    c = math.prod(shape[d + 1:]) if d < ndim - 1 else 1
    itemsize = jnp.dtype(x.dtype).itemsize
    inv_n = 1.0 / n
    total_bytes = b * n * c * itemsize

    if (not _force_grid) and total_bytes <= _TINY_BYTES:
        # Tiny input (the EVC-block case): one block, no grid-step overhead.
        x3 = x.reshape(b, n, c)
        out = pl.pallas_call(
            functools.partial(_mean_tiny_kernel, inv_n=inv_n),
            out_shape=jax.ShapeDtypeStruct((b, 1, c), x.dtype),
        )(x3)
    elif c == 1:
        # Reducing the last (collapsed) axis: lane-dense (b, n) view.
        x2 = x.reshape(b, n)
        block_b, block_n = _choose_tiles_last(b, n, itemsize)
        if _block_n is not None:
            block_n = _block_n
        grid = (pl.cdiv(b, block_b), pl.cdiv(n, block_n))
        needs_mask = (n % block_n) != 0
        out = pl.pallas_call(
            functools.partial(_mean_last_kernel, inv_n=inv_n, n_total=n,
                              block_n=block_n, needs_mask=needs_mask),
            out_shape=jax.ShapeDtypeStruct((b, 1), x.dtype),
            grid_spec=pltpu.PrefetchScalarGridSpec(
                num_scalar_prefetch=0,
                grid=grid,
                in_specs=[pl.BlockSpec((block_b, block_n), lambda i, k: (i, k))],
                out_specs=pl.BlockSpec((block_b, 1), lambda i, k: (i, 0)),
                scratch_shapes=[pltpu.VMEM((block_b, 1), jnp.float32)],
            ),
            compiler_params=pltpu.CompilerParams(
                dimension_semantics=("parallel", "arbitrary"),
                vmem_limit_bytes=_VMEM_LIMIT),
        )(x2)
    else:
        # General mid-axis reduction over the (b, n, c) view (pure reshape).
        x3 = x.reshape(b, n, c)
        block_b, block_n, block_c = _choose_tiles_mid(b, n, c, itemsize)
        if _block_n is not None:
            block_n = _block_n
        grid = (pl.cdiv(b, block_b), pl.cdiv(c, block_c), pl.cdiv(n, block_n))
        needs_mask = (n % block_n) != 0
        out = pl.pallas_call(
            functools.partial(_mean_mid_kernel, inv_n=inv_n, n_total=n,
                              block_n=block_n, needs_mask=needs_mask),
            out_shape=jax.ShapeDtypeStruct((b, 1, c), x.dtype),
            grid_spec=pltpu.PrefetchScalarGridSpec(
                num_scalar_prefetch=0,
                grid=grid,                               # reduction axis last
                in_specs=[pl.BlockSpec((block_b, block_n, block_c),
                                       lambda i, j, k: (i, k, j))],
                out_specs=pl.BlockSpec((block_b, 1, block_c),
                                       lambda i, j, k: (i, 0, j)),
                scratch_shapes=[pltpu.VMEM((block_b, 1, block_c), jnp.float32)],
            ),
            compiler_params=pltpu.CompilerParams(
                dimension_semantics=("parallel", "parallel", "arbitrary"),
                vmem_limit_bytes=_VMEM_LIMIT),
        )(x3)

    out_shape = shape[:d] + ((1,) if keep_dim else ()) + shape[d + 1:]
    return out.reshape(out_shape)


if __name__ == "__main__":
    key = jax.random.PRNGKey(0)
    k0, k1, k2 = jax.random.split(key, 3)

    # 1) EVC-block usage: Mean(dim=1) on the (B, num_codes, C) encoded feature.
    #    Tiny input -> single-block fast path.
    B, K, C = 2, 64, 32
    x = jax.random.normal(k0, (B, K, C), dtype=jnp.float32)
    out = jax.block_until_ready(mean_forward(x, dim=1, keep_dim=False))
    ref = jnp.mean(x, axis=1)
    assert out.shape == ref.shape
    assert jnp.allclose(out, ref, rtol=1e-5, atol=1e-5), "mismatch (tiny path, dim=1)"

    out_kd = jax.block_until_ready(mean_forward(x, dim=1, keep_dim=True))
    ref_kd = jnp.mean(x, axis=1, keepdims=True)
    assert out_kd.shape == ref_kd.shape
    assert jnp.allclose(out_kd, ref_kd, rtol=1e-5, atol=1e-5), "mismatch (keep_dim)"

    # 2) Mid-axis gridded path: non-divisible reduction length exercises the
    #    persistent f32 accumulator (4 reduction steps) plus in-kernel masking.
    x2 = jax.random.normal(k1, (2, 200, 256), dtype=jnp.float32)
    out2 = jax.block_until_ready(
        mean_forward(x2, dim=1, _force_grid=True, _block_n=64))
    ref2 = jnp.mean(x2, axis=1)
    assert jnp.allclose(out2, ref2, rtol=1e-4, atol=2e-4), "mismatch (mid path, masked)"

    # 3) Default tile selection on a >1 MiB input (multi-prefix-row blocks).
    x3 = jax.random.normal(k2, (8, 1024, 256), dtype=jnp.float32)
    out3 = jax.block_until_ready(mean_forward(x3, dim=1))
    ref3 = jnp.mean(x3, axis=1)
    assert jnp.allclose(out3, ref3, rtol=1e-4, atol=2e-4), "mismatch (mid path, default)"

    # 4) Last-axis reduction (lane-dense c == 1 path) with masking.
    x4 = jax.random.normal(k0, (16, 300), dtype=jnp.float32)
    out4 = jax.block_until_ready(
        mean_forward(x4, dim=-1, _force_grid=True, _block_n=128))
    ref4 = jnp.mean(x4, axis=-1)
    assert out4.shape == ref4.shape
    assert jnp.allclose(out4, ref4, rtol=1e-4, atol=2e-4), "mismatch (last-axis path)"

    print("KERNEL_OK")
</pallas_src>

<mosaic_0001>
module attributes {stable_mosaic.version = 11 : i64} {
  func.func @_mean_tiny_kernel(%arg0: memref<2x64x32xf32, #tpu.memory_space<vmem>>, %arg1: memref<2x1x32xf32, #tpu.memory_space<vmem>>) attributes {dimension_semantics = [], scalar_prefetch = 0 : i64, scratch_operands = 0 : i64, tpu.core_type = #tpu.core_type<tc>} {
    %c0 = arith.constant 0 : index
    %c0_0 = arith.constant 0 : index
    %c0_1 = arith.constant 0 : index
    %0 = vector.load %arg0[%c0, %c0_0, %c0_1] : memref<2x64x32xf32, #tpu.memory_space<vmem>>, vector<2x64x32xf32>
    %cst = arith.constant dense<0.000000e+00> : vector<2x32xf32>
    %1 = vector.multi_reduction <add>, %0, %cst [1] : vector<2x64x32xf32> to vector<2x32xf32>
    %2 = vector.shape_cast %1 : vector<2x32xf32> to vector<2x1x32xf32>
    %cst_2 = arith.constant 1.562500e-02 : f32
    %3 = vector.broadcast %cst_2 : f32 to vector<2x1x32xf32>
    %4 = arith.mulf %2, %3 : vector<2x1x32xf32>
    %c0_3 = arith.constant 0 : index
    %c0_4 = arith.constant 0 : index
    %c0_5 = arith.constant 0 : index
    %5 = vector.load %arg1[%c0_3, %c0_4, %c0_5] : memref<2x1x32xf32, #tpu.memory_space<vmem>>, vector<2x1x32xf32>
    tpu.vector_store %arg1[%c0_3, %c0_4, %c0_5], %4 {strides = array<i32>} : memref<2x1x32xf32, #tpu.memory_space<vmem>>, vector<2x1x32xf32>,
    return
  }
}

</mosaic_0001>

<llo_original>
// kernel: tpu_custom_call.1
$region0: #{tpu_custom_call.1}
  #allocation0 [shape = 'u32[]', space=smem, size = 0x4, offset = 0x4, fixed_abs, tag = 'smem constant byte address 0x4 - core index']
  #allocation1 [shape = 'u32[72,128]{1,0:T(1,128)}', space=vmem, size = 0x9000, scoped, tag = 'internal scratch']
  %s0 = inlined_call_operand.vmem [shape: f32[2,64,32], index: 0, kind: input, shape index: {}]
  %s1 = inlined_call_operand.hbm [shape: f32[2,1,32], index: 1, kind: output, shape index: {}]
  %s2 = sld [smem:[#allocation0]]
  $region14: #{tpu_custom_call.1} parent=0
    _
  %s4 = ssub.s32 1, %s2
  %s5 = scalar_select 0, %s4, %s2
  $region1: #{tpu_custom_call.1} parent=0
    #allocation2 [shape = 'u8[1024]{0}', space=vmem, size = 0x400, scoped, tag = 'output window, operand 0, single buffered']
    #allocation3 [shape = 's32[1]{0}', space=sflag, size = 0x4, scoped, tag = 'scoped memory for tpu_custom_call.1']
    %6 = vsyncpa [#allocation3], 0
    // Predicated region
    $region2: #{tpu_custom_call.1} parent=1 // pred_check
      _
    $region3: #{tpu_custom_call.1} parent=1 // pred_check_branch
      %8 = sbr.rel (0) target = $region5
    $region4: #{tpu_custom_call.1} parent=1 // pred_region
      _
    $region5: #{tpu_custom_call.1} parent=1 // pred_fallthru
      _
    %v9 = vld [vmem:[%s0] sm:$0xff]
    %v10 = vld [vmem:[%s0 + $0x8] sm:$0xff]
    %v11 = vld [vmem:[%s0 + $0x10] sm:$0xff]
    %v12 = vld [vmem:[%s0 + $0x18] sm:$0xff]
    %v13 = vld [vmem:[%s0 + $0x20] sm:$0xff]
    %v14 = vld [vmem:[%s0 + $0x28] sm:$0xff]
    %v15 = vld [vmem:[%s0 + $0x30] sm:$0xff]
    %v16 = vld [vmem:[%s0 + $0x38] sm:$0xff]
    %v17 = vld [vmem:[%s0 + $0x40] sm:$0xff]
    %v18 = vld [vmem:[%s0 + $0x48] sm:$0xff]
    %v19 = vld [vmem:[%s0 + $0x50] sm:$0xff]
    %v20 = vld [vmem:[%s0 + $0x58] sm:$0xff]
    %v21 = vld [vmem:[%s0 + $0x60] sm:$0xff]
    %v22 = vld [vmem:[%s0 + $0x68] sm:$0xff]
    %v23 = vld [vmem:[%s0 + $0x70] sm:$0xff]
    %v24 = vld [vmem:[%s0 + $0x78] sm:$0xff]
    %vm25 = vcmask 261120
    %v26 = vsel %vm25, %v9, 0.0
    %v27 = vsel %vm25, %v10, 0.0
    %v28 = vadd.f32 %v26, %v27
    %v29 = vsel %vm25, %v11, 0.0
    %v30 = vadd.f32 %v28, %v29
    %v31 = vsel %vm25, %v12, 0.0
    %v32 = vadd.f32 %v30, %v31
    %v33 = vsel %vm25, %v13, 0.0
    %v34 = vadd.f32 %v32, %v33
    %v35 = vsel %vm25, %v14, 0.0
    %v36 = vadd.f32 %v34, %v35
    %v37 = vsel %vm25, %v15, 0.0
    %v38 = vadd.f32 %v36, %v37
    %v39 = vsel %vm25, %v16, 0.0
    %v40 = vadd.f32 %v38, %v39
    %v41 = vrot.slane %v40, 4
    %v42 = vadd.f32 %v40, %v41
    %v43 = vrot.slane %v42, 2
    %v44 = vadd.f32 %v42, %v43
    %v45 = vrot.slane %v44, 1
    %v46 = vadd.f32 %v44, %v45
    %v47 = vsel %vm25, %v17, 0.0
    %v48 = vsel %vm25, %v18, 0.0
    %v49 = vadd.f32 %v47, %v48
    %v50 = vsel %vm25, %v19, 0.0
    %v51 = vadd.f32 %v49, %v50
    %v52 = vsel %vm25, %v20, 0.0
    %v53 = vadd.f32 %v51, %v52
    %v54 = vsel %vm25, %v21, 0.0
    %v55 = vadd.f32 %v53, %v54
    %v56 = vsel %vm25, %v22, 0.0
    %v57 = vadd.f32 %v55, %v56
    %v58 = vsel %vm25, %v23, 0.0
    %v59 = vadd.f32 %v57, %v58
    %v60 = vsel %vm25, %v24, 0.0
    %v61 = vadd.f32 %v59, %v60
    %v62 = vrot.slane %v61, 4
    %v63 = vadd.f32 %v61, %v62
    %v64 = vrot.slane %v63, 2
    %v65 = vadd.f32 %v63, %v64
    %v66 = vrot.slane %v65, 1
    %v67 = vadd.f32 %v65, %v66
    %v68 = vmul.f32 %v46, 0.015625
    %v69 = vmul.f32 %v67, 0.015625
    %vm70 = vcmask 253952
    %71 = vst.msk [vmem:[#allocation2] sm:$0x1] %vm70, %v68
    %72 = vst.msk [vmem:[#allocation2 + $0x1] sm:$0x1] %vm70, %v69
    // Predicated region
    $region6: #{tpu_custom_call.1} parent=1 // pred_check
      _
    $region7: #{tpu_custom_call.1} parent=1 // pred_check_branch
      %74 = sbr.rel (0) target = $region9
    $region8: #{tpu_custom_call.1} parent=1 // pred_region
      %76 = vsyncadd [#allocation3], 0
      %s77 = sshll.u32 [#allocation2], 4
      %s78 = int_to_ptr.vmem [resolvable:$true] %s77
      %s79 = sshll.u32 %s1, 4
      %s80 = int_to_ptr.hbm [resolvable:$true] %s79
      %85 = dma.vmem_to_hbm [thread:$0]  %s78, 32, %s80, [#allocation3], 16, 16, 1
    $region9: #{tpu_custom_call.1} parent=1 // pred_fallthru
      _
    // Predicated region
    $region10: #{tpu_custom_call.1} parent=1 // pred_check
      _
    $region11: #{tpu_custom_call.1} parent=1 // pred_check_branch
      %87 = sbr.rel (0) target = $region13
    $region12: #{tpu_custom_call.1} parent=1 // pred_region
      %89 = dma.done [#allocation3], 32
    $region13: #{tpu_custom_call.1} parent=1 // pred_fallthru
      _
    %90 = vsyncpa [#allocation3], 1

</llo_original>
